<compile_context>
chip_gen: v7x
topology: tpu7x:2x2x1
jax: 0.10.0
libtpu: 0.0.40
codegen_flags: <defaults>
</compile_context>

<pallas_src>
import functools

import jax
import jax.numpy as jnp
from jax.experimental import pallas as pl
from jax.experimental.pallas import tpu as pltpu

PAD = 128          # lane-dense padded width for input/hidden/output features
BIAS_ROWS = 8      # bias slab rows (sublane-aligned); rows 0,1,2 hold b1,b2,b3


def dqn_kernel(x_ref, w_ref, b_ref, o_ref):
    # x_ref: [TB, 128] f32   w_ref: [384, 128] bf16   b_ref: [8, 128] f32
    x = x_ref[...].astype(jnp.bfloat16)

    w1 = w_ref[0:128, :]
    w2 = w_ref[128:256, :]
    w3 = w_ref[256:384, :]
    b1 = b_ref[0:1, :]
    b2 = b_ref[1:2, :]
    b3 = b_ref[2:3, :]

    # fc1 + relu (bf16 MXU inputs, f32 accumulation, f32 elementwise)
    h1 = jnp.dot(x, w1, preferred_element_type=jnp.float32) + b1
    h1 = jnp.maximum(h1, 0.0)
    # fc2 + relu
    h2 = jnp.dot(h1.astype(jnp.bfloat16), w2, preferred_element_type=jnp.float32) + b2
    h2 = jnp.maximum(h2, 0.0)
    # fc3 (no activation), lane-dense [TB, 128] store
    o_ref[...] = jnp.dot(h2.astype(jnp.bfloat16), w3,
                         preferred_element_type=jnp.float32) + b3


def pack_params(params):
    """Pack (w1,b1,w2,b2,w3,b3) into one bf16 weight slab and one f32 bias slab.

    Weights are [in, out] (transposed vs. PyTorch's nn.Linear). Done once,
    outside the kernel (free layout plumbing on resident weights).
    """
    w1, b1, w2, b2, w3, b3 = params

    def pad_w(w):
        out = jnp.zeros((PAD, PAD), jnp.float32)
        return out.at[: w.shape[0], : w.shape[1]].set(w)

    w_slab = jnp.concatenate([pad_w(w1), pad_w(w2), pad_w(w3)], axis=0)
    w_slab = w_slab.astype(jnp.bfloat16)                       # [384, 128] bf16

    b_slab = jnp.zeros((BIAS_ROWS, PAD), jnp.float32)
    b_slab = b_slab.at[0, : b1.shape[-1]].set(b1.reshape(-1))
    b_slab = b_slab.at[1, : b2.shape[-1]].set(b2.reshape(-1))
    b_slab = b_slab.at[2, : b3.shape[-1]].set(b3.reshape(-1))  # [8, 128] f32
    return w_slab, b_slab


@functools.partial(jax.jit, static_argnames=("output_dim", "block_b"))
def dqn_forward(x, w_slab, b_slab, *, output_dim=9, block_b=128):
    """x: [B, input_dim] f32 -> Q-values [B, output_dim] f32."""
    B, in_dim = x.shape
    Bp = pl.cdiv(B, block_b) * block_b

    # Zero-pad batch to a tile multiple and features to the lane-dense width.
    xp = jnp.zeros((Bp, PAD), jnp.float32).at[:B, :in_dim].set(x)

    out = pl.pallas_call(
        dqn_kernel,
        out_shape=jax.ShapeDtypeStruct((Bp, PAD), jnp.float32),
        grid=(Bp // block_b,),
        in_specs=[
            pl.BlockSpec((block_b, PAD), lambda i: (i, 0)),        # x tile
            pl.BlockSpec((3 * PAD, PAD), lambda i: (0, 0)),        # weights (resident)
            pl.BlockSpec((BIAS_ROWS, PAD), lambda i: (0, 0)),      # biases  (resident)
        ],
        out_specs=pl.BlockSpec((block_b, PAD), lambda i: (i, 0)),  # lane-dense out
        compiler_params=pltpu.CompilerParams(
            dimension_semantics=("parallel",),                     # shard batch on v7x
        ),
    )(xp, w_slab, b_slab)

    return out[:B, :output_dim]


def init_params(key, input_dim=9, hidden_dim=64, output_dim=9):
    """Deterministic init mirroring nn.Linear default: U(-1/sqrt(fan_in), +)."""
    ks = jax.random.split(key, 6)

    def lin(kw, kb, fan_in, fan_out):
        bound = 1.0 / jnp.sqrt(jnp.float32(fan_in))
        w = jax.random.uniform(kw, (fan_in, fan_out), jnp.float32, -bound, bound)
        b = jax.random.uniform(kb, (1, fan_out), jnp.float32, -bound, bound)
        return w, b

    w1, b1 = lin(ks[0], ks[1], input_dim, hidden_dim)
    w2, b2 = lin(ks[2], ks[3], hidden_dim, hidden_dim)
    w3, b3 = lin(ks[4], ks[5], hidden_dim, output_dim)
    return (w1, b1, w2, b2, w3, b3)


def dqn_reference(x, params):
    """Pure-JAX reference mimicking kernel numerics (bf16 matmul inputs, f32 acc)."""
    w1, b1, w2, b2, w3, b3 = params

    def mm(a, w):
        return jnp.dot(a.astype(jnp.bfloat16), w.astype(jnp.bfloat16),
                       preferred_element_type=jnp.float32)

    h1 = jnp.maximum(mm(x, w1) + b1, 0.0)
    h2 = jnp.maximum(mm(h1, w2) + b2, 0.0)
    return mm(h2, w3) + b3


if __name__ == "__main__":
    key = jax.random.PRNGKey(0)
    k_params, k_x = jax.random.split(key)

    input_dim, hidden_dim, output_dim = 9, 64, 9
    batch = 256  # many board states per call; grid of 2 tiles of 128 rows

    params = init_params(k_params, input_dim, hidden_dim, output_dim)
    w_slab, b_slab = pack_params(params)  # packed/padded once, reused per call

    # Tic-tac-toe board encodings in {-1, 0, 1}, as float32.
    x = jax.random.randint(k_x, (batch, input_dim), -1, 2).astype(jnp.float32)

    out = dqn_forward(x, w_slab, b_slab, output_dim=output_dim, block_b=128)
    out = jax.block_until_ready(out)

    ref = dqn_reference(x, params)
    assert out.shape == (batch, output_dim)
    assert jnp.allclose(out, ref, atol=1e-3, rtol=1e-3), "mismatch vs reference"

    print("KERNEL_OK")
</pallas_src>

<mosaic_0001>
module attributes {stable_mosaic.version = 11 : i64} {
  func.func @dqn_kernel(%arg0: i32, %arg1: memref<128x128xf32, #tpu.memory_space<vmem>>, %arg2: memref<384x128xbf16, #tpu.memory_space<vmem>>, %arg3: memref<8x128xf32, #tpu.memory_space<vmem>>, %arg4: memref<128x128xf32, #tpu.memory_space<vmem>>) attributes {dimension_semantics = [#tpu.dimension_semantics<parallel>], iteration_bounds = array<i64: 2>, scalar_prefetch = 0 : i64, scratch_operands = 0 : i64, tpu.core_type = #tpu.core_type<tc>, window_params = [{transform_indices = @transform_0, window_bounds = array<i64: 128, 128>}, {pipeline_mode = #tpu.pipeline_mode<synchronous>, transform_indices = @transform_1, window_bounds = array<i64: 384, 128>}, {pipeline_mode = #tpu.pipeline_mode<synchronous>, transform_indices = @transform_2, window_bounds = array<i64: 8, 128>}, {transform_indices = @transform_3, window_bounds = array<i64: 128, 128>}]} {
    %c0 = arith.constant 0 : index
    %c0_0 = arith.constant 0 : index
    %0 = vector.load %arg1[%c0, %c0_0] : memref<128x128xf32, #tpu.memory_space<vmem>>, vector<128x128xf32>
    %1 = arith.truncf %0 : vector<128x128xf32> to vector<128x128xbf16>
    %c0_1 = arith.constant 0 : index
    %c0_2 = arith.constant 0 : index
    %2 = vector.load %arg2[%c0_1, %c0_2] : memref<384x128xbf16, #tpu.memory_space<vmem>>, vector<128x128xbf16>
    %c128 = arith.constant 128 : index
    %c0_3 = arith.constant 0 : index
    %3 = vector.load %arg2[%c128, %c0_3] : memref<384x128xbf16, #tpu.memory_space<vmem>>, vector<128x128xbf16>
    %c256 = arith.constant 256 : index
    %c0_4 = arith.constant 0 : index
    %4 = vector.load %arg2[%c256, %c0_4] : memref<384x128xbf16, #tpu.memory_space<vmem>>, vector<128x128xbf16>
    %c0_5 = arith.constant 0 : index
    %c0_6 = arith.constant 0 : index
    %5 = vector.load %arg3[%c0_5, %c0_6] : memref<8x128xf32, #tpu.memory_space<vmem>>, vector<1x128xf32>
    %c1 = arith.constant 1 : index
    %c0_7 = arith.constant 0 : index
    %6 = vector.load %arg3[%c1, %c0_7] : memref<8x128xf32, #tpu.memory_space<vmem>>, vector<1x128xf32>
    %c2 = arith.constant 2 : index
    %c0_8 = arith.constant 0 : index
    %7 = vector.load %arg3[%c2, %c0_8] : memref<8x128xf32, #tpu.memory_space<vmem>>, vector<1x128xf32>
    %cst = arith.constant dense<0.000000e+00> : vector<128x128xf32>
    %8 = tpu.matmul %1, %2, %cst {dimension_numbers = #tpu.dot_dimension_numbers<[1], [0], [0], [1], [0, 0, 1, 1], [], []>} : vector<128x128xbf16>, vector<128x128xbf16>, vector<128x128xf32> -> vector<128x128xf32>
    %9 = vector.broadcast %5 : vector<1x128xf32> to vector<128x128xf32>
    %10 = arith.addf %8, %9 : vector<128x128xf32>
    %cst_9 = arith.constant 0.000000e+00 : f32
    %11 = vector.broadcast %cst_9 : f32 to vector<128x128xf32>
    %12 = arith.maximumf %10, %11 : vector<128x128xf32>
    %13 = arith.truncf %12 : vector<128x128xf32> to vector<128x128xbf16>
    %cst_10 = arith.constant dense<0.000000e+00> : vector<128x128xf32>
    %14 = tpu.matmul %13, %3, %cst_10 {dimension_numbers = #tpu.dot_dimension_numbers<[1], [0], [0], [1], [0, 0, 1, 1], [], []>} : vector<128x128xbf16>, vector<128x128xbf16>, vector<128x128xf32> -> vector<128x128xf32>
    %15 = vector.broadcast %6 : vector<1x128xf32> to vector<128x128xf32>
    %16 = arith.addf %14, %15 : vector<128x128xf32>
    %cst_11 = arith.constant 0.000000e+00 : f32
    %17 = vector.broadcast %cst_11 : f32 to vector<128x128xf32>
    %18 = arith.maximumf %16, %17 : vector<128x128xf32>
    %19 = arith.truncf %18 : vector<128x128xf32> to vector<128x128xbf16>
    %cst_12 = arith.constant dense<0.000000e+00> : vector<128x128xf32>
    %20 = tpu.matmul %19, %4, %cst_12 {dimension_numbers = #tpu.dot_dimension_numbers<[1], [0], [0], [1], [0, 0, 1, 1], [], []>} : vector<128x128xbf16>, vector<128x128xbf16>, vector<128x128xf32> -> vector<128x128xf32>
    %21 = vector.broadcast %7 : vector<1x128xf32> to vector<128x128xf32>
    %22 = arith.addf %20, %21 : vector<128x128xf32>
    %c0_13 = arith.constant 0 : index
    %c0_14 = arith.constant 0 : index
    %23 = vector.load %arg4[%c0_13, %c0_14] : memref<128x128xf32, #tpu.memory_space<vmem>>, vector<128x128xf32>
    tpu.vector_store %arg4[%c0_13, %c0_14], %22 {strides = array<i32>} : memref<128x128xf32, #tpu.memory_space<vmem>>, vector<128x128xf32>,
    return
  }
  func.func @transform_0(%arg0: i32) -> (i32, i32) {
    %c0_i32 = arith.constant 0 : i32
    %c0_i32_0 = arith.constant 0 : i32
    return %arg0, %c0_i32 : i32, i32
  }
  func.func @transform_1(%arg0: i32) -> (i32, i32) {
    %c0_i32 = arith.constant 0 : i32
    %c0_i32_0 = arith.constant 0 : i32
    %c0_i32_1 = arith.constant 0 : i32
    return %c0_i32, %c0_i32_0 : i32, i32
  }
  func.func @transform_2(%arg0: i32) -> (i32, i32) {
    %c0_i32 = arith.constant 0 : i32
    %c0_i32_0 = arith.constant 0 : i32
    %c0_i32_1 = arith.constant 0 : i32
    return %c0_i32, %c0_i32_0 : i32, i32
  }
  func.func @transform_3(%arg0: i32) -> (i32, i32) {
    %c0_i32 = arith.constant 0 : i32
    %c0_i32_0 = arith.constant 0 : i32
    return %arg0, %c0_i32 : i32, i32
  }
}

</mosaic_0001>

<llo_original>
// kernel: dqn_forward.1
$region0: #{dqn_forward.1}
  #allocation0 [shape = 'u32[]', space=smem, size = 0x4, offset = 0x4, fixed_abs, tag = 'smem constant byte address 0x4 - core index']
  #allocation1 [shape = 'u32[144,128]{1,0:T(1,128)}', space=vmem, size = 0x12000, scoped, tag = 'internal scratch']
  %s0 = inlined_call_operand.vmem [shape: f32[256,128], index: 0, kind: input, shape index: {}]
  %s1 = inlined_call_operand.vmem [shape: bf16[384,128], index: 1, kind: input, shape index: {}]
  %s2 = inlined_call_operand.vmem [shape: f32[8,128], index: 2, kind: input, shape index: {}]
  %s3 = inlined_call_operand.vmem [shape: f32[256,128], index: 3, kind: output, shape index: {}]
  %s4 = sld [smem:[#allocation0]]
  $region45: #{dqn_forward.1} parent=0
    _
  %s6 = ssub.s32 1, %s4
  %s7 = scalar_select 0, %s6, %s4
  loop: start=0, step=1, limit=4
  $region2: #{dqn_forward.1} parent=0 // loop_pre_header
    _
  $region3: #{dqn_forward.1} parent=0 // loop_header
    %s9 = sphi 0, %s13
    %p10 = scmp.ge.s32.totalorder %s9, 4
    %s19 = sphi 0, %s21
    %s22 = sphi 0, %s19
    %s23 = sphi 0, %s22
    %s39 = sphi 0, %s23
    %s43 = sphi 0, %s43
    %s45 = sphi 0, %s43
    %s46 = sphi 0, %s45
    %s60 = sphi 0, %s46
    %s64 = sphi 0, %s64
    %s66 = sphi 0, %s64
    %s67 = sphi 0, %s66
    %s81 = sphi 0, %s67
    %s87 = sphi 0, %s89
    %s90 = sphi 0, %s87
    %s91 = sphi 0, %s90
    %s107 = sphi 0, %s91
  $region4: #{dqn_forward.1} parent=0 // loop_header_branch
    %12 = sbr.rel (%p10) target = $region8
  $region5: #{dqn_forward.1} parent=0 // loop_body
    %s14 = ssub.s32 %s9, 1
    %s15 = ssub.s32 %s9, 2
    %s16 = sadd.s32 %s9, 1
    %s17 = ssub.s32 %s9, %s16
    %p18 = scmp.eq.s32.totalorder %s17, 0
    %s20 = sadd.s32 %s19, 1
    %s21 = scalar_select %p18, %s19, %s20
    %p24 = pneg %p18
    %p25 = scmp.eq.s32.totalorder %s9, 1
    %p26 = por %p24, %p25
    %p27 = scmp.ne.s32.totalorder %s19, %s22
    %p28 = scmp.eq.s32.totalorder %s9, 0
    %p29 = por %p27, %p28
    %p30 = scmp.ne.s32.totalorder %s19, %s22
    %p31 = scmp.eq.s32.totalorder %s14, 1
    %p32 = por %p30, %p31
    %p33 = scmp.ne.s32.totalorder %s22, %s23
    %p34 = scmp.eq.s32.totalorder %s14, 0
    %p35 = por %p33, %p34
    %p36 = scmp.ne.s32.totalorder %s22, %s23
    %p37 = scmp.eq.s32.totalorder %s15, 1
    %p38 = por %p36, %p37
    %p40 = scmp.ne.s32.totalorder %s23, %s39
    %p41 = scmp.eq.s32.totalorder %s15, 0
    %p42 = por %p40, %p41
    %s44 = sadd.s32 %s43, 1
    %p47 = scmp.eq.s32.totalorder %s9, 1
    %p48 = scmp.ne.s32.totalorder %s43, %s45
    %p49 = scmp.eq.s32.totalorder %s9, 0
    %p50 = por %p48, %p49
    %p51 = scmp.ne.s32.totalorder %s43, %s45
    %p52 = scmp.eq.s32.totalorder %s14, 1
    %p53 = por %p51, %p52
    %p54 = scmp.ne.s32.totalorder %s45, %s46
    %p55 = scmp.eq.s32.totalorder %s14, 0
    %p56 = por %p54, %p55
    %p57 = scmp.ne.s32.totalorder %s45, %s46
    %p58 = scmp.eq.s32.totalorder %s15, 1
    %p59 = por %p57, %p58
    %p61 = scmp.ne.s32.totalorder %s46, %s60
    %p62 = scmp.eq.s32.totalorder %s15, 0
    %p63 = por %p61, %p62
    %s65 = sadd.s32 %s64, 1
    %p68 = scmp.eq.s32.totalorder %s9, 1
    %p69 = scmp.ne.s32.totalorder %s64, %s66
    %p70 = scmp.eq.s32.totalorder %s9, 0
    %p71 = por %p69, %p70
    %p72 = scmp.ne.s32.totalorder %s64, %s66
    %p73 = scmp.eq.s32.totalorder %s14, 1
    %p74 = por %p72, %p73
    %p75 = scmp.ne.s32.totalorder %s66, %s67
    %p76 = scmp.eq.s32.totalorder %s14, 0
    %p77 = por %p75, %p76
    %p78 = scmp.ne.s32.totalorder %s66, %s67
    %p79 = scmp.eq.s32.totalorder %s15, 1
    %p80 = por %p78, %p79
    %p82 = scmp.ne.s32.totalorder %s67, %s81
    %p83 = scmp.eq.s32.totalorder %s15, 0
    %p84 = por %p82, %p83
    %s85 = ssub.s32 %s9, %s16
    %p86 = scmp.eq.s32.totalorder %s85, 0
    %s88 = sadd.s32 %s87, 1
    %s89 = scalar_select %p86, %s87, %s88
    %p92 = pneg %p86
    %p93 = scmp.eq.s32.totalorder %s9, 1
    %p94 = por %p92, %p93
    %p95 = scmp.ne.s32.totalorder %s87, %s90
    %p96 = scmp.eq.s32.totalorder %s9, 0
    %p97 = por %p95, %p96
    %p98 = scmp.ne.s32.totalorder %s87, %s90
    %p99 = scmp.eq.s32.totalorder %s14, 1
    %p100 = por %p98, %p99
    %p101 = scmp.ne.s32.totalorder %s90, %s91
    %p102 = scmp.eq.s32.totalorder %s14, 0
    %p103 = por %p101, %p102
    %p104 = scmp.ne.s32.totalorder %s90, %s91
    %p105 = scmp.eq.s32.totalorder %s15, 1
    %p106 = por %p104, %p105
    %p108 = scmp.ne.s32.totalorder %s91, %s107
    %p109 = scmp.eq.s32.totalorder %s15, 0
    %p110 = por %p108, %p109
    %p111 = scmp.le.s32.totalorder 1, %s9
    %p112 = scmp.lt.s32.totalorder %s9, 3
    %p113 = pnand %p111, %p112
    %p114 = pneg %p113
    // Predicated region
    $region9: #{dqn_forward.1} parent=5 // pred_check
      _
    $region10: #{dqn_forward.1} parent=5 // pred_check_branch
      %116 = sbr.rel (%p113) target = $region12
    $region11: #{dqn_forward.1} parent=5 // pred_region
      %s117 = ssub.s32 %s9, 1
      // Predicated region
      $region13: #{dqn_forward.1} parent=11 // pred_check
        %p118 = pneg %p56
      $region14: #{dqn_forward.1} parent=11 // pred_check_branch
        %120 = sbr.rel (%p118) target = $region16
      $region15: #{dqn_forward.1} parent=11 // pred_region
        _
      $region16: #{dqn_forward.1} parent=11 // pred_fallthru
        _
      // Predicated region
      $region17: #{dqn_forward.1} parent=11 // pred_check
        %p121 = pneg %p77
      $region18: #{dqn_forward.1} parent=11 // pred_check_branch
        %123 = sbr.rel (%p121) target = $region20
      $region19: #{dqn_forward.1} parent=11 // pred_region
        _
      $region20: #{dqn_forward.1} parent=11 // pred_fallthru
        _
    $region12: #{dqn_forward.1} parent=5 // pred_fallthru
      _
    %p124 = scmp.lt.s32.totalorder %s9, 2
    // Predicated region
    $region21: #{dqn_forward.1} parent=5 // pred_check
      %p125 = pneg %p124
    $region22: #{dqn_forward.1} parent=5 // pred_check_branch
      %127 = sbr.rel (%p125) target = $region24
    $region23: #{dqn_forward.1} parent=5 // pred_region
      // Predicated region
      $region25: #{dqn_forward.1} parent=23 // pred_check
        %p128 = pneg %p29
      $region26: #{dqn_forward.1} parent=23 // pred_check_branch
        %130 = sbr.rel (%p128) target = $region28
      $region27: #{dqn_forward.1} parent=23 // pred_region
        %s131 = smul.u32 16, %s9
        %p132 = scmp.lt.s32.totalorder %s131, 31
        %s133 = scalar_select %p132, %s131, 31
        %s134 = smul.addr %s133, 8
        %s135 = scalar_lea.vmem %s0, %s134
        %s136 = smul.u32 16, %s9
      $region28: #{dqn_forward.1} parent=23 // pred_fallthru
        _
    $region24: #{dqn_forward.1} parent=5 // pred_fallthru
      _
    %p137 = scmp.le.s32.totalorder 1, %s9
    %p138 = scmp.lt.s32.totalorder %s9, 3
    %p139 = pnand %p137, %p138
    %p140 = pneg %p139
    // Predicated region
    $region29: #{dqn_forward.1} parent=5 // pred_check
      _
    $region30: #{dqn_forward.1} parent=5 // pred_check_branch
      %142 = sbr.rel (%p139) target = $region32
    $region31: #{dqn_forward.1} parent=5 // pred_region
      %s143 = ssub.s32 %s9, 1
      %s144 = smul.u32 16, %s14
      %p145 = scmp.lt.s32.totalorder %s144, 31
      %s146 = scalar_select %p145, %s144, 31
      %s147 = smul.addr %s146, 8
      %s148 = scalar_lea.vmem %s0, %s147
      %p149 = pneg %p35
      %p150 = pneg %p32
      %p151 = pneg %p56
      %p152 = pneg %p53
      %p153 = pneg %p77
      %p154 = pneg %p74
      %p155 = pneg %p103
      %p156 = pneg %p100
      %s157 = smul.u32 16, %s14
      %p158 = scmp.lt.s32.totalorder %s157, 31
      %s159 = scalar_select %p158, %s157, 31
      %s160 = smul.addr %s159, 8
      %s161 = scalar_lea.vmem %s3, %s160
      %s162 = smul.u32 16, %s14
      %p163 = scmp.lt.s32.totalorder %s162, 31
      %s164 = scalar_select %p163, %s162, 31
      %s165 = smul.addr %s164, 8
      %s166 = scalar_lea.vmem %s0, %s165
      %s167 = smul.u32 16, %s14
      %s168 = smul.u32 16, %s14
      %p169 = scmp.lt.s32.totalorder %s168, 31
      %s170 = scalar_select %p169, %s168, 31
      %s171 = smul.addr %s170, 8
      %s172 = scalar_lea.vmem %s3, %s171
      %s173 = smul.u32 16, %s14
      %v175 = vld [vmem:[%s166] sm:$0xff]
      %v176 = vld [vmem:[%s166 + $0x8] sm:$0xff]
      %v177 = vld [vmem:[%s166 + $0x10] sm:$0xff]
      %v178 = vld [vmem:[%s166 + $0x18] sm:$0xff]
      %v179 = vld [vmem:[%s166 + $0x20] sm:$0xff]
      %v180 = vld [vmem:[%s166 + $0x28] sm:$0xff]
      %v181 = vld [vmem:[%s166 + $0x30] sm:$0xff]
      %v182 = vld [vmem:[%s166 + $0x38] sm:$0xff]
      %v183 = vld [vmem:[%s166 + $0x40] sm:$0xff]
      %v184 = vld [vmem:[%s166 + $0x48] sm:$0xff]
      %v185 = vld [vmem:[%s166 + $0x50] sm:$0xff]
      %v186 = vld [vmem:[%s166 + $0x58] sm:$0xff]
      %v187 = vld [vmem:[%s166 + $0x60] sm:$0xff]
      %v188 = vld [vmem:[%s166 + $0x68] sm:$0xff]
      %v189 = vld [vmem:[%s166 + $0x70] sm:$0xff]
      %v190 = vld [vmem:[%s166 + $0x78] sm:$0xff]
      %v191 = vpack.c.bf16 %v176, %v175
      %v192 = vpack.c.bf16 %v178, %v177
      %v193 = vpack.c.bf16 %v180, %v179
      %v194 = vpack.c.bf16 %v182, %v181
      %v195 = vpack.c.bf16 %v184, %v183
      %v196 = vpack.c.bf16 %v186, %v185
      %v197 = vpack.c.bf16 %v188, %v187
      %v198 = vpack.c.bf16 %v190, %v189
      %v199 = vld [vmem:[%s1] sm:$0xf]
      %v200 = vld [vmem:[%s1 + $0x4] sm:$0xf]
      %v201 = vld [vmem:[%s1 + $0x8] sm:$0xf]
      %v202 = vld [vmem:[%s1 + $0xc] sm:$0xf]
      %v203 = vld [vmem:[%s1 + $0x10] sm:$0xf]
      %v204 = vld [vmem:[%s1 + $0x14] sm:$0xf]
      %v205 = vld [vmem:[%s1 + $0x18] sm:$0xf]
      %v206 = vld [vmem:[%s1 + $0x1c] sm:$0xf]
      %v207 = vld [vmem:[%s1 + $0x20] sm:$0xf]
      %v208 = vld [vmem:[%s1 + $0x24] sm:$0xf]
      %v209 = vld [vmem:[%s1 + $0x28] sm:$0xf]
      %v210 = vld [vmem:[%s1 + $0x2c] sm:$0xf]
      %v211 = vld [vmem:[%s1 + $0x30] sm:$0xf]
      %v212 = vld [vmem:[%s1 + $0x34] sm:$0xf]
      %v213 = vld [vmem:[%s1 + $0x38] sm:$0xf]
      %v214 = vld [vmem:[%s1 + $0x3c] sm:$0xf]
      %v215 = vld [vmem:[%s1 + $0x40] sm:$0xf]
      %v216 = vld [vmem:[%s1 + $0x44] sm:$0xf]
      %v217 = vld [vmem:[%s1 + $0x48] sm:$0xf]
      %v218 = vld [vmem:[%s1 + $0x4c] sm:$0xf]
      %v219 = vld [vmem:[%s1 + $0x50] sm:$0xf]
      %v220 = vld [vmem:[%s1 + $0x54] sm:$0xf]
      %v221 = vld [vmem:[%s1 + $0x58] sm:$0xf]
      %v222 = vld [vmem:[%s1 + $0x5c] sm:$0xf]
      %v223 = vld [vmem:[%s1 + $0x60] sm:$0xf]
      %v224 = vld [vmem:[%s1 + $0x64] sm:$0xf]
      %v225 = vld [vmem:[%s1 + $0x68] sm:$0xf]
      %v226 = vld [vmem:[%s1 + $0x6c] sm:$0xf]
      %v227 = vld [vmem:[%s1 + $0x70] sm:$0xf]
      %v228 = vld [vmem:[%s1 + $0x74] sm:$0xf]
      %v229 = vld [vmem:[%s1 + $0x78] sm:$0xf]
      %v230 = vld [vmem:[%s1 + $0x7c] sm:$0xf]
      %v231 = vld [vmem:[%s1 + $0x80] sm:$0xf]
      %v232 = vld [vmem:[%s1 + $0x84] sm:$0xf]
      %v233 = vld [vmem:[%s1 + $0x88] sm:$0xf]
      %v234 = vld [vmem:[%s1 + $0x8c] sm:$0xf]
      %v235 = vld [vmem:[%s1 + $0x90] sm:$0xf]
      %v236 = vld [vmem:[%s1 + $0x94] sm:$0xf]
      %v237 = vld [vmem:[%s1 + $0x98] sm:$0xf]
      %v238 = vld [vmem:[%s1 + $0x9c] sm:$0xf]
      %v239 = vld [vmem:[%s1 + $0xa0] sm:$0xf]
      %v240 = vld [vmem:[%s1 + $0xa4] sm:$0xf]
      %v241 = vld [vmem:[%s1 + $0xa8] sm:$0xf]
      %v242 = vld [vmem:[%s1 + $0xac] sm:$0xf]
      %v243 = vld [vmem:[%s1 + $0xb0] sm:$0xf]
      %v244 = vld [vmem:[%s1 + $0xb4] sm:$0xf]
      %v245 = vld [vmem:[%s1 + $0xb8] sm:$0xf]
      %v246 = vld [vmem:[%s1 + $0xbc] sm:$0xf]
      %v247 = vld [vmem:[%s2] sm:$0x1]
      %v248 = vld [vmem:[%s2 + $0x1] sm:$0x1]
      %v249 = vld [vmem:[%s2 + $0x2] sm:$0x1]
      %v250 = vlaneseq
      %v251 = vshrl.u32 %v250, 7
      %v252 = vsub.s32 0, %v251
      %v253 = vrot.slane %v247, %v252
      %v270 = vunpack.c.l.b16 %v199
      %v271 = vunpack.c.l.b16 %v200
      %v272 = vunpack.c.l.b16 %v201
      %v273 = vunpack.c.l.b16 %v202
      %v274 = vunpack.c.l.b16 %v203
      %v275 = vunpack.c.l.b16 %v204
      %v276 = vunpack.c.l.b16 %v205
      %v277 = vunpack.c.l.b16 %v206
      %v278 = vunpack.c.l.b16 %v207
      %v279 = vunpack.c.l.b16 %v208
      %v280 = vunpack.c.l.b16 %v209
      %v281 = vunpack.c.l.b16 %v210
      %v282 = vunpack.c.l.b16 %v211
      %v283 = vunpack.c.l.b16 %v212
      %v284 = vunpack.c.l.b16 %v213
      %v285 = vunpack.c.l.b16 %v214
      %v286 = vpack.c.b16 %v271, %v270
      %v287 = vpack.c.b16 %v273, %v272
      %v288 = vpack.c.b16 %v275, %v274
      %v289 = vpack.c.b16 %v277, %v276
      %v290 = vpack.c.b16 %v279, %v278
      %v291 = vpack.c.b16 %v281, %v280
      %v292 = vpack.c.b16 %v283, %v282
      %v293 = vpack.c.b16 %v285, %v284
      %302 = vmatprep.subr.bf16.mxu0 0
      %303 = vmatpush1.bf16.msra.mxu0 %v286
      %304 = vmatprep.subr.bf16.mxu0 0
      %305 = vmatpush1.bf16.msra.mxu0 %v287
      %306 = vmatprep.subr.bf16.mxu0 0
      %307 = vmatpush1.bf16.msra.mxu0 %v288
      %308 = vmatprep.subr.bf16.mxu0 0
      %309 = vmatpush1.bf16.msra.mxu0 %v289
      %310 = vmatprep.subr.bf16.mxu0 0
      %311 = vmatpush1.bf16.msra.mxu0 %v290
      %312 = vmatprep.subr.bf16.mxu0 0
      %313 = vmatpush1.bf16.msra.mxu0 %v291
      %314 = vmatprep.subr.bf16.mxu0 0
      %315 = vmatpush1.bf16.msra.mxu0 %v292
      %316 = vmatprep.subr.bf16.mxu0 0
      %317 = vmatpush1.bf16.msra.mxu0 %v293
      %318 = vmatprep.subr.bf16.mxu0 0
      %319 = vmatpush1.bf16.msra.mxu0 0
      %320 = vmatprep.subr.bf16.mxu0 0
      %321 = vmatpush1.bf16.msra.mxu0 0
      %322 = vmatprep.subr.bf16.mxu0 0
      %323 = vmatpush1.bf16.msra.mxu0 0
      %324 = vmatprep.subr.bf16.mxu0 0
      %325 = vmatpush1.bf16.msra.mxu0 0
      %326 = vmatprep.subr.bf16.mxu0 0
      %327 = vmatpush1.bf16.msra.mxu0 0
      %328 = vmatprep.subr.bf16.mxu0 0
      %329 = vmatpush1.bf16.msra.mxu0 0
      %330 = vmatprep.subr.bf16.mxu0 0
      %331 = vmatpush1.bf16.msra.mxu0 0
      %332 = vmatprep.subr.bf16.mxu0 0
      %333 = vmatpush1.bf16.msra.mxu0 0
      %334 = vmatprep.mubr.bf16.mxu0 0
      %335 = vmatmul.mubr.bf16.gmra.mrb[0].mxu0 %v191
      %v336 = vpop.f32.mrb[0].mxu0
      %v337 = vadd.f32 %v253, %v336
      %v338 = vpop.f32.mrb[0].mxu0
      %v339 = vpop.f32.mrb[0].mxu0
      %v340 = vadd.f32 %v253, %v339
      %v341 = vpop.f32.mrb[0].mxu0
      %342 = vmatprep.mubr.bf16.mxu0 0
      %343 = vmatmul.mubr.bf16.gmra.mrb[0].mxu0 %v192
      %v344 = vpop.f32.mrb[0].mxu0
      %v345 = vadd.f32 %v253, %v344
      %v346 = vpop.f32.mrb[0].mxu0
      %v347 = vpop.f32.mrb[0].mxu0
      %v348 = vadd.f32 %v253, %v347
      %v349 = vpop.f32.mrb[0].mxu0
      %350 = vmatprep.mubr.bf16.mxu0 0
      %351 = vmatmul.mubr.bf16.gmra.mrb[0].mxu0 %v193
      %v352 = vpop.f32.mrb[0].mxu0
      %v353 = vadd.f32 %v253, %v352
      %v354 = vpop.f32.mrb[0].mxu0
      %v355 = vpop.f32.mrb[0].mxu0
      %v356 = vadd.f32 %v253, %v355
      %v357 = vpop.f32.mrb[0].mxu0
      %358 = vmatprep.mubr.bf16.mxu0 0
      %359 = vmatmul.mubr.bf16.gmra.mrb[0].mxu0 %v194
      %v360 = vpop.f32.mrb[0].mxu0
      %v361 = vadd.f32 %v253, %v360
      %v362 = vpop.f32.mrb[0].mxu0
      %v363 = vpop.f32.mrb[0].mxu0
      %v364 = vadd.f32 %v253, %v363
      %v365 = vpop.f32.mrb[0].mxu0
      %366 = vmatprep.mubr.bf16.mxu0 0
      %367 = vmatmul.mubr.bf16.gmra.mrb[0].mxu0 %v195
      %v368 = vpop.f32.mrb[0].mxu0
      %v369 = vadd.f32 %v253, %v368
      %v370 = vpop.f32.mrb[0].mxu0
      %v371 = vpop.f32.mrb[0].mxu0
      %v372 = vadd.f32 %v253, %v371
      %v373 = vpop.f32.mrb[0].mxu0
      %374 = vmatprep.mubr.bf16.mxu0 0
      %375 = vmatmul.mubr.bf16.gmra.mrb[0].mxu0 %v196
      %v376 = vpop.f32.mrb[0].mxu0
      %v377 = vadd.f32 %v253, %v376
      %v378 = vpop.f32.mrb[0].mxu0
      %v379 = vpop.f32.mrb[0].mxu0
      %v380 = vadd.f32 %v253, %v379
      %v381 = vpop.f32.mrb[0].mxu0
      %382 = vmatprep.mubr.bf16.mxu0 0
      %383 = vmatmul.mubr.bf16.gmra.mrb[0].mxu0 %v197
      %v384 = vpop.f32.mrb[0].mxu0
      %v385 = vadd.f32 %v253, %v384
      %v386 = vpop.f32.mrb[0].mxu0
      %v387 = vpop.f32.mrb[0].mxu0
      %v388 = vadd.f32 %v253, %v387
      %v389 = vpop.f32.mrb[0].mxu0
      %390 = vmatprep.mubr.bf16.mxu0 0
      %391 = vmatmul.mubr.bf16.gmra.mrb[0].mxu0 %v198
      %v392 = vpop.f32.mrb[0].mxu0
      %v393 = vadd.f32 %v253, %v392
      %v394 = vpop.f32.mrb[0].mxu0
      %v395 = vpop.f32.mrb[0].mxu0
      %v396 = vadd.f32 %v253, %v395
      %v397 = vpop.f32.mrb[0].mxu0
      %398 = vdwg.mxu0
      %v399 = vmax.f32 %v337, 0.0
      %v400 = vmax.f32 %v340, 0.0
      %v401 = vmax.f32 %v345, 0.0
      %v402 = vmax.f32 %v348, 0.0
      %v403 = vmax.f32 %v353, 0.0
      %v404 = vmax.f32 %v356, 0.0
      %v405 = vmax.f32 %v361, 0.0
      %v406 = vmax.f32 %v364, 0.0
      %v407 = vmax.f32 %v369, 0.0
      %v408 = vmax.f32 %v372, 0.0
      %v409 = vmax.f32 %v377, 0.0
      %v410 = vmax.f32 %v380, 0.0
      %v411 = vmax.f32 %v385, 0.0
      %v412 = vmax.f32 %v388, 0.0
      %v413 = vmax.f32 %v393, 0.0
      %v414 = vmax.f32 %v396, 0.0
      %v415 = vpack.c.bf16 %v400, %v399
      %v416 = vpack.c.bf16 %v402, %v401
      %v417 = vpack.c.bf16 %v404, %v403
      %v418 = vpack.c.bf16 %v406, %v405
      %v419 = vpack.c.bf16 %v408, %v407
      %v420 = vpack.c.bf16 %v410, %v409
      %v421 = vpack.c.bf16 %v412, %v411
      %v422 = vpack.c.bf16 %v414, %v413
      %v423 = vlaneseq
      %v424 = vshrl.u32 %v423, 7
      %v425 = vsub.s32 0, %v424
      %v426 = vrot.slane %v248, %v425
      %v443 = vunpack.c.l.b16 %v215
      %v444 = vunpack.c.l.b16 %v216
      %v445 = vunpack.c.l.b16 %v217
      %v446 = vunpack.c.l.b16 %v218
      %v447 = vunpack.c.l.b16 %v219
      %v448 = vunpack.c.l.b16 %v220
      %v449 = vunpack.c.l.b16 %v221
      %v450 = vunpack.c.l.b16 %v222
      %v451 = vunpack.c.l.b16 %v223
      %v452 = vunpack.c.l.b16 %v224
      %v453 = vunpack.c.l.b16 %v225
      %v454 = vunpack.c.l.b16 %v226
      %v455 = vunpack.c.l.b16 %v227
      %v456 = vunpack.c.l.b16 %v228
      %v457 = vunpack.c.l.b16 %v229
      %v458 = vunpack.c.l.b16 %v230
      %v459 = vpack.c.b16 %v444, %v443
      %v460 = vpack.c.b16 %v446, %v445
      %v461 = vpack.c.b16 %v448, %v447
      %v462 = vpack.c.b16 %v450, %v449
      %v463 = vpack.c.b16 %v452, %v451
      %v464 = vpack.c.b16 %v454, %v453
      %v465 = vpack.c.b16 %v456, %v455
      %v466 = vpack.c.b16 %v458, %v457
      %475 = vmatprep.subr.bf16.mxu0 0
      %476 = vmatpush1.bf16.msra.mxu0 %v459
      %477 = vmatprep.subr.bf16.mxu0 0
      %478 = vmatpush1.bf16.msra.mxu0 %v460
      %479 = vmatprep.subr.bf16.mxu0 0
      %480 = vmatpush1.bf16.msra.mxu0 %v461
      %481 = vmatprep.subr.bf16.mxu0 0
      %482 = vmatpush1.bf16.msra.mxu0 %v462
      %483 = vmatprep.subr.bf16.mxu0 0
      %484 = vmatpush1.bf16.msra.mxu0 %v463
      %485 = vmatprep.subr.bf16.mxu0 0
      %486 = vmatpush1.bf16.msra.mxu0 %v464
      %487 = vmatprep.subr.bf16.mxu0 0
      %488 = vmatpush1.bf16.msra.mxu0 %v465
      %489 = vmatprep.subr.bf16.mxu0 0
      %490 = vmatpush1.bf16.msra.mxu0 %v466
      %491 = vmatprep.subr.bf16.mxu0 0
      %492 = vmatpush1.bf16.msra.mxu0 0
      %493 = vmatprep.subr.bf16.mxu0 0
      %494 = vmatpush1.bf16.msra.mxu0 0
      %495 = vmatprep.subr.bf16.mxu0 0
      %496 = vmatpush1.bf16.msra.mxu0 0
      %497 = vmatprep.subr.bf16.mxu0 0
      %498 = vmatpush1.bf16.msra.mxu0 0
      %499 = vmatprep.subr.bf16.mxu0 0
      %500 = vmatpush1.bf16.msra.mxu0 0
      %501 = vmatprep.subr.bf16.mxu0 0
      %502 = vmatpush1.bf16.msra.mxu0 0
      %503 = vmatprep.subr.bf16.mxu0 0
      %504 = vmatpush1.bf16.msra.mxu0 0
      %505 = vmatprep.subr.bf16.mxu0 0
      %506 = vmatpush1.bf16.msra.mxu0 0
      %507 = vmatprep.mubr.bf16.mxu0 0
      %508 = vmatmul.mubr.bf16.gmra.mrb[0].mxu0 %v415
      %v509 = vpop.f32.mrb[0].mxu0
      %v510 = vadd.f32 %v426, %v509
      %v511 = vpop.f32.mrb[0].mxu0
      %v512 = vpop.f32.mrb[0].mxu0
      %v513 = vadd.f32 %v426, %v512
      %v514 = vpop.f32.mrb[0].mxu0
      %515 = vmatprep.mubr.bf16.mxu0 0
      %516 = vmatmul.mubr.bf16.gmra.mrb[0].mxu0 %v416
      %v517 = vpop.f32.mrb[0].mxu0
      %v518 = vadd.f32 %v426, %v517
      %v519 = vpop.f32.mrb[0].mxu0
      %v520 = vpop.f32.mrb[0].mxu0
      %v521 = vadd.f32 %v426, %v520
      %v522 = vpop.f32.mrb[0].mxu0
      %523 = vmatprep.mubr.bf16.mxu0 0
      %524 = vmatmul.mubr.bf16.gmra.mrb[0].mxu0 %v417
      %v525 = vpop.f32.mrb[0].mxu0
      %v526 = vadd.f32 %v426, %v525
      %v527 = vpop.f32.mrb[0].mxu0
      %v528 = vpop.f32.mrb[0].mxu0
      %v529 = vadd.f32 %v426, %v528
      %v530 = vpop.f32.mrb[0].mxu0
      %531 = vmatprep.mubr.bf16.mxu0 0
      %532 = vmatmul.mubr.bf16.gmra.mrb[0].mxu0 %v418
      %v533 = vpop.f32.mrb[0].mxu0
      %v534 = vadd.f32 %v426, %v533
      %v535 = vpop.f32.mrb[0].mxu0
      %v536 = vpop.f32.mrb[0].mxu0
      %v537 = vadd.f32 %v426, %v536
      %v538 = vpop.f32.mrb[0].mxu0
      %539 = vmatprep.mubr.bf16.mxu0 0
      %540 = vmatmul.mubr.bf16.gmra.mrb[0].mxu0 %v419
      %v541 = vpop.f32.mrb[0].mxu0
      %v542 = vadd.f32 %v426, %v541
      %v543 = vpop.f32.mrb[0].mxu0
      %v544 = vpop.f32.mrb[0].mxu0
      %v545 = vadd.f32 %v426, %v544
      %v546 = vpop.f32.mrb[0].mxu0
      %547 = vmatprep.mubr.bf16.mxu0 0
      %548 = vmatmul.mubr.bf16.gmra.mrb[0].mxu0 %v420
      %v549 = vpop.f32.mrb[0].mxu0
      %v550 = vadd.f32 %v426, %v549
      %v551 = vpop.f32.mrb[0].mxu0
      %v552 = vpop.f32.mrb[0].mxu0
      %v553 = vadd.f32 %v426, %v552
      %v554 = vpop.f32.mrb[0].mxu0
      %555 = vmatprep.mubr.bf16.mxu0 0
      %556 = vmatmul.mubr.bf16.gmra.mrb[0].mxu0 %v421
      %v557 = vpop.f32.mrb[0].mxu0
      %v558 = vadd.f32 %v426, %v557
      %v559 = vpop.f32.mrb[0].mxu0
      %v560 = vpop.f32.mrb[0].mxu0
      %v561 = vadd.f32 %v426, %v560
      %v562 = vpop.f32.mrb[0].mxu0
      %563 = vmatprep.mubr.bf16.mxu0 0
      %564 = vmatmul.mubr.bf16.gmra.mrb[0].mxu0 %v422
      %v565 = vpop.f32.mrb[0].mxu0
      %v566 = vadd.f32 %v426, %v565
      %v567 = vpop.f32.mrb[0].mxu0
      %v568 = vpop.f32.mrb[0].mxu0
      %v569 = vadd.f32 %v426, %v568
      %v570 = vpop.f32.mrb[0].mxu0
      %571 = vdwg.mxu0
      %v572 = vmax.f32 %v510, 0.0
      %v573 = vmax.f32 %v513, 0.0
      %v574 = vmax.f32 %v518, 0.0
      %v575 = vmax.f32 %v521, 0.0
      %v576 = vmax.f32 %v526, 0.0
      %v577 = vmax.f32 %v529, 0.0
      %v578 = vmax.f32 %v534, 0.0
      %v579 = vmax.f32 %v537, 0.0
      %v580 = vmax.f32 %v542, 0.0
      %v581 = vmax.f32 %v545, 0.0
      %v582 = vmax.f32 %v550, 0.0
      %v583 = vmax.f32 %v553, 0.0
      %v584 = vmax.f32 %v558, 0.0
      %v585 = vmax.f32 %v561, 0.0
      %v586 = vmax.f32 %v566, 0.0
      %v587 = vmax.f32 %v569, 0.0
      %v588 = vpack.c.bf16 %v573, %v572
      %v589 = vpack.c.bf16 %v575, %v574
      %v590 = vpack.c.bf16 %v577, %v576
      %v591 = vpack.c.bf16 %v579, %v578
      %v592 = vpack.c.bf16 %v581, %v580
      %v593 = vpack.c.bf16 %v583, %v582
      %v594 = vpack.c.bf16 %v585, %v584
      %v595 = vpack.c.bf16 %v587, %v586
      %v596 = vlaneseq
      %v597 = vshrl.u32 %v596, 7
      %v598 = vsub.s32 0, %v597
      %v599 = vrot.slane %v249, %v598
      %v616 = vunpack.c.l.b16 %v231
      %v617 = vunpack.c.l.b16 %v232
      %v618 = vunpack.c.l.b16 %v233
      %v619 = vunpack.c.l.b16 %v234
      %v620 = vunpack.c.l.b16 %v235
      %v621 = vunpack.c.l.b16 %v236
      %v622 = vunpack.c.l.b16 %v237
      %v623 = vunpack.c.l.b16 %v238
      %v624 = vunpack.c.l.b16 %v239
      %v625 = vunpack.c.l.b16 %v240
      %v626 = vunpack.c.l.b16 %v241
      %v627 = vunpack.c.l.b16 %v242
      %v628 = vunpack.c.l.b16 %v243
      %v629 = vunpack.c.l.b16 %v244
      %v630 = vunpack.c.l.b16 %v245
      %v631 = vunpack.c.l.b16 %v246
      %v632 = vpack.c.b16 %v617, %v616
      %v633 = vpack.c.b16 %v619, %v618
      %v634 = vpack.c.b16 %v621, %v620
      %v635 = vpack.c.b16 %v623, %v622
      %v636 = vpack.c.b16 %v625, %v624
      %v637 = vpack.c.b16 %v627, %v626
      %v638 = vpack.c.b16 %v629, %v628
      %v639 = vpack.c.b16 %v631, %v630
      %648 = vmatprep.subr.bf16.mxu0 0
      %649 = vmatpush1.bf16.msra.mxu0 %v632
      %650 = vmatprep.subr.bf16.mxu0 0
      %651 = vmatpush1.bf16.msra.mxu0 %v633
      %652 = vmatprep.subr.bf16.mxu0 0
      %653 = vmatpush1.bf16.msra.mxu0 %v634
      %654 = vmatprep.subr.bf16.mxu0 0
      %655 = vmatpush1.bf16.msra.mxu0 %v635
      %656 = vmatprep.subr.bf16.mxu0 0
      %657 = vmatpush1.bf16.msra.mxu0 %v636
      %658 = vmatprep.subr.bf16.mxu0 0
      %659 = vmatpush1.bf16.msra.mxu0 %v637
      %660 = vmatprep.subr.bf16.mxu0 0
      %661 = vmatpush1.bf16.msra.mxu0 %v638
      %662 = vmatprep.subr.bf16.mxu0 0
      %663 = vmatpush1.bf16.msra.mxu0 %v639
      %664 = vmatprep.subr.bf16.mxu0 0
      %665 = vmatpush1.bf16.msra.mxu0 0
      %666 = vmatprep.subr.bf16.mxu0 0
      %667 = vmatpush1.bf16.msra.mxu0 0
      %668 = vmatprep.subr.bf16.mxu0 0
      %669 = vmatpush1.bf16.msra.mxu0 0
      %670 = vmatprep.subr.bf16.mxu0 0
      %671 = vmatpush1.bf16.msra.mxu0 0
      %672 = vmatprep.subr.bf16.mxu0 0
      %673 = vmatpush1.bf16.msra.mxu0 0
      %674 = vmatprep.subr.bf16.mxu0 0
      %675 = vmatpush1.bf16.msra.mxu0 0
      %676 = vmatprep.subr.bf16.mxu0 0
      %677 = vmatpush1.bf16.msra.mxu0 0
      %678 = vmatprep.subr.bf16.mxu0 0
      %679 = vmatpush1.bf16.msra.mxu0 0
      %680 = vmatprep.mubr.bf16.mxu0 0
      %681 = vmatmul.mubr.bf16.gmra.mrb[0].mxu0 %v588
      %v682 = vpop.f32.mrb[0].mxu0
      %v683 = vadd.f32 %v599, %v682
      %v684 = vpop.f32.mrb[0].mxu0
      %v685 = vpop.f32.mrb[0].mxu0
      %v686 = vadd.f32 %v599, %v685
      %v687 = vpop.f32.mrb[0].mxu0
      %688 = vmatprep.mubr.bf16.mxu0 0
      %689 = vmatmul.mubr.bf16.gmra.mrb[0].mxu0 %v589
      %v690 = vpop.f32.mrb[0].mxu0
      %v691 = vadd.f32 %v599, %v690
      %v692 = vpop.f32.mrb[0].mxu0
      %v693 = vpop.f32.mrb[0].mxu0
      %v694 = vadd.f32 %v599, %v693
      %v695 = vpop.f32.mrb[0].mxu0
      %696 = vmatprep.mubr.bf16.mxu0 0
      %697 = vmatmul.mubr.bf16.gmra.mrb[0].mxu0 %v590
      %v698 = vpop.f32.mrb[0].mxu0
      %v699 = vadd.f32 %v599, %v698
      %v700 = vpop.f32.mrb[0].mxu0
      %v701 = vpop.f32.mrb[0].mxu0
      %v702 = vadd.f32 %v599, %v701
      %v703 = vpop.f32.mrb[0].mxu0
      %704 = vmatprep.mubr.bf16.mxu0 0
      %705 = vmatmul.mubr.bf16.gmra.mrb[0].mxu0 %v591
      %v706 = vpop.f32.mrb[0].mxu0
      %v707 = vadd.f32 %v599, %v706
      %v708 = vpop.f32.mrb[0].mxu0
      %v709 = vpop.f32.mrb[0].mxu0
      %v710 = vadd.f32 %v599, %v709
      %v711 = vpop.f32.mrb[0].mxu0
      %712 = vmatprep.mubr.bf16.mxu0 0
      %713 = vmatmul.mubr.bf16.gmra.mrb[0].mxu0 %v592
      %v714 = vpop.f32.mrb[0].mxu0
      %v715 = vadd.f32 %v599, %v714
      %v716 = vpop.f32.mrb[0].mxu0
      %v717 = vpop.f32.mrb[0].mxu0
      %v718 = vadd.f32 %v599, %v717
      %v719 = vpop.f32.mrb[0].mxu0
      %720 = vmatprep.mubr.bf16.mxu0 0
      %721 = vmatmul.mubr.bf16.gmra.mrb[0].mxu0 %v593
      %v722 = vpop.f32.mrb[0].mxu0
      %v723 = vadd.f32 %v599, %v722
      %v724 = vpop.f32.mrb[0].mxu0
      %v725 = vpop.f32.mrb[0].mxu0
      %v726 = vadd.f32 %v599, %v725
      %v727 = vpop.f32.mrb[0].mxu0
      %728 = vmatprep.mubr.bf16.mxu0 0
      %729 = vmatmul.mubr.bf16.gmra.mrb[0].mxu0 %v594
      %v730 = vpop.f32.mrb[0].mxu0
      %v731 = vadd.f32 %v599, %v730
      %v732 = vpop.f32.mrb[0].mxu0
      %v733 = vpop.f32.mrb[0].mxu0
      %v734 = vadd.f32 %v599, %v733
      %v735 = vpop.f32.mrb[0].mxu0
      %736 = vmatprep.mubr.bf16.mxu0 0
      %737 = vmatmul.mubr.bf16.gmra.mrb[0].mxu0 %v595
      %v738 = vpop.f32.mrb[0].mxu0
      %v739 = vadd.f32 %v599, %v738
      %v740 = vpop.f32.mrb[0].mxu0
      %v741 = vpop.f32.mrb[0].mxu0
      %v742 = vadd.f32 %v599, %v741
      %v743 = vpop.f32.mrb[0].mxu0
      %744 = vdwg.mxu0
      %745 = vst [vmem:[%s172] sm:$0xff] %v683
      %746 = vst [vmem:[%s172 + $0x8] sm:$0xff] %v686
      %747 = vst [vmem:[%s172 + $0x10] sm:$0xff] %v691
      %748 = vst [vmem:[%s172 + $0x18] sm:$0xff] %v694
      %749 = vst [vmem:[%s172 + $0x20] sm:$0xff] %v699
      %750 = vst [vmem:[%s172 + $0x28] sm:$0xff] %v702
      %751 = vst [vmem:[%s172 + $0x30] sm:$0xff] %v707
      %752 = vst [vmem:[%s172 + $0x38] sm:$0xff] %v710
      %753 = vst [vmem:[%s172 + $0x40] sm:$0xff] %v715
      %754 = vst [vmem:[%s172 + $0x48] sm:$0xff] %v718
      %755 = vst [vmem:[%s172 + $0x50] sm:$0xff] %v723
      %756 = vst [vmem:[%s172 + $0x58] sm:$0xff] %v726
      %757 = vst [vmem:[%s172 + $0x60] sm:$0xff] %v731
      %758 = vst [vmem:[%s172 + $0x68] sm:$0xff] %v734
      %759 = vst [vmem:[%s172 + $0x70] sm:$0xff] %v739
      %760 = vst [vmem:[%s172 + $0x78] sm:$0xff] %v742
      %s761 = smul.u32 16, %s14
      %p762 = scmp.lt.s32.totalorder %s761, 31
      %s763 = scalar_select %p762, %s761, 31
      %s764 = smul.addr %s763, 8
      %s765 = scalar_lea.vmem %s3, %s764
      // Predicated region
      $region33: #{dqn_forward.1} parent=31 // pred_check
        %p766 = pneg %p100
      $region34: #{dqn_forward.1} parent=31 // pred_check_branch
        %768 = sbr.rel (%p766) target = $region36
      $region35: #{dqn_forward.1} parent=31 // pred_region
        %s769 = smul.u32 16, %s14
      $region36: #{dqn_forward.1} parent=31 // pred_fallthru
        _
    $region32: #{dqn_forward.1} parent=5 // pred_fallthru
      _
    %p770 = scmp.le.s32.totalorder 2, %s9
    // Predicated region
    $region37: #{dqn_forward.1} parent=5 // pred_check
      %p771 = pneg %p770
    $region38: #{dqn_forward.1} parent=5 // pred_check_branch
      %773 = sbr.rel (%p771) target = $region40
    $region39: #{dqn_forward.1} parent=5 // pred_region
      %s774 = ssub.s32 %s9, 2
      // Predicated region
      $region41: #{dqn_forward.1} parent=39 // pred_check
        %p775 = pneg %p106
      $region42: #{dqn_forward.1} parent=39 // pred_check_branch
        %777 = sbr.rel (%p775) target = $region44
      $region43: #{dqn_forward.1} parent=39 // pred_region
        %s778 = smul.u32 16, %s15
        %p779 = scmp.lt.s32.totalorder %s778, 31
        %s780 = scalar_select %p779, %s778, 31
        %s781 = smul.addr %s780, 8
        %s782 = scalar_lea.vmem %s3, %s781
      $region44: #{dqn_forward.1} parent=39 // pred_fallthru
        _
    $region40: #{dqn_forward.1} parent=5 // pred_fallthru
      _
  $region6: #{dqn_forward.1} parent=0 // loop_footer
    %s13 = sadd.s32 1, %s9
  $region7: #{dqn_forward.1} parent=0 // loop_footer_branch
    %8 = sbr.rel target = $region3
  $region8: #{dqn_forward.1} parent=0 // loop_exit
    _

</llo_original>
